<compile_context>
chip_gen: v5e
topology: v5e:2x2
jax: 0.10.0
libtpu: 0.0.40
codegen_flags: <defaults>
</compile_context>

<pallas_src>
import functools

import jax
import jax.numpy as jnp
from jax.experimental import pallas as pl
from jax.experimental.pallas import tpu as pltpu


def _self_attention_kernel(h_ref, w1t_ref, w2t_ref, m_ref, a_ref, *, matmul_dtype):
    # h_ref  : (S, Bt, H)   hidden states, native seq-major layout (input dtype)
    # w1t_ref: (H, Ap)      W1^T, attention dim zero-padded to Ap (multiple of 128)
    # w2t_ref: (Ap, NH)     W2^T with matching zero-padded rows
    # m_ref  : (Bt, NH, H)  output M block (f32)
    # a_ref  : (S, Bt, NH)  output attention block, seq-major (f32)
    h3 = h_ref[...]
    s_len, bt, hid = h3.shape
    nh = w2t_ref.shape[-1]

    # Fold (S, Bt, H) -> (S*Bt, H). Bt is a multiple of the sublane tile for
    # h's dtype (guaranteed by the wrapper), so this is a free, tile-aligned
    # merge (no VMEM relayout copy).
    h2 = h3.reshape(s_len * bt, hid)
    hm = h2.astype(matmul_dtype)

    # x = tanh(hidden @ W1^T): MXU matmul with M = S*Bt, f32 accumulate + tanh.
    x = jnp.tanh(jnp.dot(hm, w1t_ref[...], preferred_element_type=jnp.float32))

    # scores = x @ W2^T: (S*Bt, NH), f32 accumulate.
    scores = jnp.dot(x.astype(matmul_dtype), w2t_ref[...],
                     preferred_element_type=jnp.float32)
    s3 = scores.reshape(s_len, bt, nh)          # free split (Bt % 8 == 0)

    # Softmax over the sequence axis (axis 0 here == PyTorch dim=1 after its
    # transpose(0, 1)). Reductions over the outer axis are cheap VPU adds/maxes.
    s_max = jnp.max(s3, axis=0, keepdims=True)  # (1, Bt, NH)
    e = jnp.exp(s3 - s_max)                     # (S, Bt, NH) f32
    denom = jnp.sum(e, axis=0, keepdims=True)   # (1, Bt, NH)
    inv = pl.reciprocal(denom, approx=True)     # EUP slot (cheap)
    inv = inv * (2.0 - denom * inv)             # one Newton step -> ~f32 exact
    p3 = e * inv                                # (S, Bt, NH) f32

    # Emit A seq-major; the tiny transpose to (B, NH, S) happens in XLA outside.
    a_ref[...] = p3.astype(a_ref.dtype)

    # M[b,n,:] = sum_s p[s,b,n] * h[s,b,:]. NH is small (CVDD uses 1..3 heads),
    # so do it per head on the VPU: avoids per-batch tiny-M MXU matmuls and any
    # in-kernel transpose of the big h block.
    # TODO(synk): for very large NH a batched MXU path (batch-major relayout)
    # would be preferable; CVDD shapes never need it.
    h3f = h3.astype(jnp.float32)
    for n in range(nh):
        w = p3[:, :, n:n + 1]                               # (S, Bt, 1)
        m_ref[:, n, :] = jnp.sum(w * h3f, axis=0).astype(m_ref.dtype)


def _vmem_capacity_bytes():
    try:
        return int(pltpu.get_tpu_info().vmem_capacity_bytes)
    except Exception:
        return 64 << 20        # conservative (v7x per-TensorCore VMEM)


def _per_row_bytes(H, Ap, NH, in_bytes, mm_bytes):
    """Rough VMEM bytes per folded row (S*Bt rows total) incl. intermediates."""
    nhl = ((NH + 127) // 128) * 128                 # lane-padded NH
    return (3 * H * in_bytes                        # double-buffered h block + value
            + H * (mm_bytes if mm_bytes != in_bytes else 0)   # bf16 cast of h
            + Ap * (4 + mm_bytes)                   # x (f32) + its matmul cast
            + 5 * nhl * 4                           # scores / e / p3 / A out buffers
            + 2 * H * 4)                            # f32 h copy + per-head product


def _pick_batch_tile(B, S, per_row_bytes, budget_bytes, sub, min_grid):
    """Pick (Bt, B_pad): Bt multiple of `sub`, sized from the VMEM byte budget,
    minimal batch padding, grid >= min_grid when achievable."""
    rows = max(0, budget_bytes) // max(1, per_row_bytes)
    bt_cap = max(sub, (rows // max(1, S)) // sub * sub)
    b_ceil = -(-B // sub) * sub
    bt_cap = min(bt_cap, b_ceil)
    can_split = (b_ceil // sub) >= min_grid
    best_key, best = None, (sub, b_ceil)
    bt = bt_cap
    while bt >= sub:
        b_pad = -(-B // bt) * bt
        grid = b_pad // bt
        waste = b_pad - B
        penalty = 0 if (grid >= min_grid or not can_split) else (1 << 40)
        key = (waste + penalty, -bt)
        if best_key is None or key < best_key:
            best_key, best = key, (bt, b_pad)
        bt -= sub
    return best


def self_attention(hidden_sbh, w1, w2, *, matmul_dtype=jnp.bfloat16,
                   batch_tile=None, min_grid=None, interpret=False):
    """Matches the PyTorch module: hidden (S, B, H) -> (M (B,NH,H), A (B,NH,S)).

    w1: (attention_size, hidden_size) = nn.Linear weight;  w2: (n_heads, attention_size).
    MXU operands use `matmul_dtype` (bf16 default); softmax/accumulation are f32.
    """
    S, B, H = hidden_sbh.shape
    A_sz, H_w = w1.shape
    NH, A_w = w2.shape
    assert H == H_w and A_sz == A_w

    in_bytes = jnp.dtype(hidden_sbh.dtype).itemsize
    mm_bytes = jnp.dtype(matmul_dtype).itemsize
    sub = max(8, 32 // in_bytes)          # sublane tile: 8 (f32), 16 (bf16), 32 (int8)

    # Pre-transpose weights once in the wrapper and zero-pad the attention dim
    # to a lane multiple of 128 (exact no-op numerically: tanh(0)=0 and the
    # padded W2 rows are zero).
    Ap = max(128, ((A_sz + 127) // 128) * 128)
    w1t = jnp.zeros((H, Ap), matmul_dtype).at[:, :A_sz].set(w1.T.astype(matmul_dtype))
    w2t = jnp.zeros((Ap, NH), matmul_dtype).at[:A_sz, :].set(w2.T.astype(matmul_dtype))

    # Generation-aware VMEM budget: ~56 MiB on v7x (64 MiB/TC), up to 112 MiB
    # on v5e/v6e (128 MiB/TC). The tile picker only spends ~half of it, leaving
    # headroom for compiler scratch and the double buffers it can't see.
    cap = _vmem_capacity_bytes()
    vmem_limit = int(min(112 << 20, cap - max(8 << 20, cap // 8)))
    vmem_limit = max(32 << 20, vmem_limit)
    if min_grid is None:
        # <=64 MiB VMEM per core => v7x-class chip with 2 TensorCores: keep
        # grid >= 2 so the "parallel" axis can be sharded across both.
        min_grid = 2 if cap <= (64 << 20) else 1

    if batch_tile is None:
        per_row = _per_row_bytes(H, Ap, NH, in_bytes, mm_bytes)
        fixed = 2 * (H * Ap + Ap * NH) * mm_bytes
        budget = int(0.5 * (vmem_limit - fixed))
        Bt, B_pad = _pick_batch_tile(B, S, per_row, budget, sub, min_grid)
    else:
        Bt = int(batch_tile)
        B_pad = -(-B // Bt) * Bt
        assert (B_pad == Bt) or (Bt % sub == 0), \
            "batch_tile must be a multiple of the sublane tile (or cover the whole batch)"

    # Zero-pad awkward batch sizes (padded columns are sliced off the outputs;
    # all-zero hidden -> uniform softmax, no NaN/Inf).
    h = hidden_sbh
    if B_pad != B:
        h = jnp.pad(h, ((0, 0), (0, B_pad - B), (0, 0)))

    grid = (B_pad // Bt,)
    kernel = functools.partial(_self_attention_kernel, matmul_dtype=matmul_dtype)

    # TODO(synk): very long S with large H would additionally need a seq-tiled
    # (online-softmax) grid axis; CVDD sentence lengths do not.
    grid_spec = pltpu.PrefetchScalarGridSpec(
        num_scalar_prefetch=0,
        grid=grid,
        in_specs=[
            pl.BlockSpec((S, Bt, H), lambda b: (0, b, 0)),   # native seq-major h
            pl.BlockSpec((H, Ap), lambda b: (0, 0)),
            pl.BlockSpec((Ap, NH), lambda b: (0, 0)),
        ],
        out_specs=[
            pl.BlockSpec((Bt, NH, H), lambda b: (b, 0, 0)),
            pl.BlockSpec((S, Bt, NH), lambda b: (0, b, 0)),
        ],
    )

    M_pad, A_sn = pl.pallas_call(
        kernel,
        out_shape=(
            jax.ShapeDtypeStruct((B_pad, NH, H), jnp.float32),
            jax.ShapeDtypeStruct((S, B_pad, NH), jnp.float32),
        ),
        grid_spec=grid_spec,
        compiler_params=pltpu.CompilerParams(
            dimension_semantics=("parallel",),
            vmem_limit_bytes=vmem_limit,
        ),
        interpret=interpret,
    )(h, w1t, w2t)

    # Tiny layout fix-ups done by XLA outside the kernel (A is small: B*NH*S).
    M = M_pad[:B]
    A = jnp.transpose(A_sn, (1, 2, 0))[:B]
    return M, A


def _reference(hidden_sbh, w1, w2):
    h = jnp.transpose(hidden_sbh, (1, 0, 2))              # (B, S, H)
    x = jnp.tanh(jnp.einsum("bsh,ah->bsa", h, w1))         # (B, S, A)
    s = jnp.einsum("bsa,na->bsn", x, w2)                   # (B, S, NH)
    p = jax.nn.softmax(s, axis=1)                          # softmax over seq
    A = jnp.transpose(p, (0, 2, 1))                        # (B, NH, S)
    M = jnp.einsum("bns,bsh->bnh", A, h)                   # (B, NH, H)
    return M, A


if __name__ == "__main__":
    key = jax.random.PRNGKey(0)

    # --- Case 1: module defaults at small shapes -----------------------------
    seq_len, batch, hidden_size = 8, 2, 32
    attention_size, n_heads = 100, 1
    k_h, k_w1, k_w2, k2_h, k2_w1, k2_w2 = jax.random.split(key, 6)

    hidden = jax.random.normal(k_h, (seq_len, batch, hidden_size), dtype=jnp.float32)
    # nn.Linear weight shapes: (out_features, in_features)
    w1 = (jax.random.uniform(k_w1, (attention_size, hidden_size), dtype=jnp.float32) - 0.5) * 0.2
    w2 = (jax.random.uniform(k_w2, (n_heads, attention_size), dtype=jnp.float32) - 0.5) * 0.2

    M_ref, A_ref = _reference(hidden, w1, w2)

    # f32 MXU path: matches the module numerics closely.
    M, A = self_attention(hidden, w1, w2, matmul_dtype=jnp.float32)
    M, A = jax.block_until_ready((M, A))
    assert M.shape == (batch, n_heads, hidden_size)
    assert A.shape == (batch, n_heads, seq_len)
    assert jnp.allclose(M, M_ref, atol=2e-5, rtol=2e-5)
    assert jnp.allclose(A, A_ref, atol=2e-5, rtol=2e-5)

    # Default path: bf16 MXU operands, f32 tanh/exp/softmax/accumulation.
    M16, A16 = self_attention(hidden, w1, w2)
    M16, A16 = jax.block_until_ready((M16, A16))
    assert jnp.allclose(M16, M_ref, atol=3e-2, rtol=3e-2)
    assert jnp.allclose(A16, A_ref, atol=3e-2, rtol=3e-2)

    # --- Case 2: odd batch (exercises padding) + multiple heads ---------------
    batch2, n_heads2 = 3, 3
    hidden2 = jax.random.normal(k2_h, (seq_len, batch2, hidden_size), dtype=jnp.float32)
    w1b = (jax.random.uniform(k2_w1, (attention_size, hidden_size), dtype=jnp.float32) - 0.5) * 0.2
    w2b = (jax.random.uniform(k2_w2, (n_heads2, attention_size), dtype=jnp.float32) - 0.5) * 0.2

    M2_ref, A2_ref = _reference(hidden2, w1b, w2b)
    M2, A2 = self_attention(hidden2, w1b, w2b)      # default bf16 path
    M2, A2 = jax.block_until_ready((M2, A2))
    assert M2.shape == (batch2, n_heads2, hidden_size)
    assert A2.shape == (batch2, n_heads2, seq_len)
    assert jnp.allclose(M2, M2_ref, atol=3e-2, rtol=3e-2)
    assert jnp.allclose(A2, A2_ref, atol=3e-2, rtol=3e-2)

    print("KERNEL_OK")
</pallas_src>

<mosaic_0001>
module attributes {stable_mosaic.version = 11 : i64} {
  func.func @_self_attention_kernel(%arg0: i32, %arg1: memref<8x8x32xf32, #tpu.memory_space<vmem>>, %arg2: memref<32x128xf32, #tpu.memory_space<vmem>>, %arg3: memref<128x1xf32, #tpu.memory_space<vmem>>, %arg4: memref<8x1x32xf32, #tpu.memory_space<vmem>>, %arg5: memref<8x8x1xf32, #tpu.memory_space<vmem>>) attributes {dimension_semantics = [#tpu.dimension_semantics<parallel>], iteration_bounds = array<i64: 1>, scalar_prefetch = 0 : i64, scratch_operands = 0 : i64, tpu.core_type = #tpu.core_type<tc>, window_params = [{transform_indices = @transform_0, window_bounds = array<i64: 8, 8, 32>}, {pipeline_mode = #tpu.pipeline_mode<synchronous>, transform_indices = @transform_1, window_bounds = array<i64: 32, 128>}, {pipeline_mode = #tpu.pipeline_mode<synchronous>, transform_indices = @transform_2, window_bounds = array<i64: 128, 1>}, {transform_indices = @transform_3, window_bounds = array<i64: 8, 1, 32>}, {transform_indices = @transform_4, window_bounds = array<i64: 8, 8, 1>}]} {
    %c0 = arith.constant 0 : index
    %c0_0 = arith.constant 0 : index
    %c0_1 = arith.constant 0 : index
    %0 = vector.load %arg1[%c0, %c0_0, %c0_1] : memref<8x8x32xf32, #tpu.memory_space<vmem>>, vector<8x8x32xf32>
    %1 = vector.shape_cast %0 : vector<8x8x32xf32> to vector<64x32xf32>
    %c0_2 = arith.constant 0 : index
    %c0_3 = arith.constant 0 : index
    %2 = vector.load %arg2[%c0_2, %c0_3] : memref<32x128xf32, #tpu.memory_space<vmem>>, vector<32x128xf32>
    %cst = arith.constant dense<0.000000e+00> : vector<64x128xf32>
    %3 = tpu.matmul %1, %2, %cst {dimension_numbers = #tpu.dot_dimension_numbers<[1], [0], [0], [1], [0, 0, 1, 1], [], []>} : vector<64x32xf32>, vector<32x128xf32>, vector<64x128xf32> -> vector<64x128xf32>
    %4 = math.tanh %3 : vector<64x128xf32>
    %c0_4 = arith.constant 0 : index
    %c0_5 = arith.constant 0 : index
    %5 = vector.load %arg3[%c0_4, %c0_5] : memref<128x1xf32, #tpu.memory_space<vmem>>, vector<128x1xf32>
    %cst_6 = arith.constant dense<0.000000e+00> : vector<64x1xf32>
    %6 = tpu.matmul %4, %5, %cst_6 {dimension_numbers = #tpu.dot_dimension_numbers<[1], [0], [0], [1], [0, 0, 1, 1], [], []>} : vector<64x128xf32>, vector<128x1xf32>, vector<64x1xf32> -> vector<64x1xf32>
    %7 = vector.shape_cast %6 : vector<64x1xf32> to vector<8x8x1xf32>
    %cst_7 = arith.constant dense<0xFF800000> : vector<8x1xf32>
    %8 = vector.multi_reduction <maximumf>, %7, %cst_7 [0] : vector<8x8x1xf32> to vector<8x1xf32>
    %9 = vector.shape_cast %8 : vector<8x1xf32> to vector<1x8x1xf32>
    %10 = vector.broadcast %9 : vector<1x8x1xf32> to vector<8x8x1xf32>
    %11 = arith.subf %7, %10 : vector<8x8x1xf32>
    %12 = math.exp %11 : vector<8x8x1xf32>
    %cst_8 = arith.constant dense<0.000000e+00> : vector<8x1xf32>
    %13 = vector.multi_reduction <add>, %12, %cst_8 [0] : vector<8x8x1xf32> to vector<8x1xf32>
    %14 = vector.shape_cast %13 : vector<8x1xf32> to vector<1x8x1xf32>
    %15 = tpu.reciprocal %14 {approx = true} : vector<1x8x1xf32> -> vector<1x8x1xf32>
    %16 = arith.mulf %14, %15 : vector<1x8x1xf32>
    %cst_9 = arith.constant 2.000000e+00 : f32
    %17 = vector.broadcast %cst_9 : f32 to vector<1x8x1xf32>
    %18 = arith.subf %17, %16 : vector<1x8x1xf32>
    %19 = arith.mulf %15, %18 : vector<1x8x1xf32>
    %20 = vector.broadcast %19 : vector<1x8x1xf32> to vector<8x8x1xf32>
    %21 = arith.mulf %12, %20 : vector<8x8x1xf32>
    %c0_10 = arith.constant 0 : index
    %c0_11 = arith.constant 0 : index
    %c0_12 = arith.constant 0 : index
    %22 = vector.load %arg5[%c0_10, %c0_11, %c0_12] : memref<8x8x1xf32, #tpu.memory_space<vmem>>, vector<8x8x1xf32>
    tpu.vector_store %arg5[%c0_10, %c0_11, %c0_12], %21 {strides = array<i32>} : memref<8x8x1xf32, #tpu.memory_space<vmem>>, vector<8x8x1xf32>,
    %23 = vector.broadcast %21 : vector<8x8x1xf32> to vector<8x8x32xf32>
    %24 = arith.mulf %23, %0 : vector<8x8x32xf32>
    %cst_13 = arith.constant dense<0.000000e+00> : vector<8x32xf32>
    %25 = vector.multi_reduction <add>, %24, %cst_13 [0] : vector<8x8x32xf32> to vector<8x32xf32>
    %c0_14 = arith.constant 0 : index
    %c0_15 = arith.constant 0 : index
    %c0_16 = arith.constant 0 : index
    %26 = vector.load %arg4[%c0_14, %c0_15, %c0_16] : memref<8x1x32xf32, #tpu.memory_space<vmem>>, vector<8x1x32xf32>
    %27 = vector.shape_cast %26 : vector<8x1x32xf32> to vector<8x32xf32>
    %28 = vector.shape_cast %25 : vector<8x32xf32> to vector<8x1x32xf32>
    tpu.vector_store %arg4[%c0_14, %c0_15, %c0_16], %28 {strides = array<i32>} : memref<8x1x32xf32, #tpu.memory_space<vmem>>, vector<8x1x32xf32>,
    return
  }
  func.func @transform_0(%arg0: i32) -> (i32, i32, i32) {
    %c0_i32 = arith.constant 0 : i32
    %c0_i32_0 = arith.constant 0 : i32
    %c0_i32_1 = arith.constant 0 : i32
    return %c0_i32, %arg0, %c0_i32_0 : i32, i32, i32
  }
  func.func @transform_1(%arg0: i32) -> (i32, i32) {
    %c0_i32 = arith.constant 0 : i32
    %c0_i32_0 = arith.constant 0 : i32
    %c0_i32_1 = arith.constant 0 : i32
    return %c0_i32, %c0_i32_0 : i32, i32
  }
  func.func @transform_2(%arg0: i32) -> (i32, i32) {
    %c0_i32 = arith.constant 0 : i32
    %c0_i32_0 = arith.constant 0 : i32
    %c0_i32_1 = arith.constant 0 : i32
    return %c0_i32, %c0_i32_0 : i32, i32
  }
  func.func @transform_3(%arg0: i32) -> (i32, i32, i32) {
    %c0_i32 = arith.constant 0 : i32
    %c0_i32_0 = arith.constant 0 : i32
    %c0_i32_1 = arith.constant 0 : i32
    return %arg0, %c0_i32, %c0_i32_0 : i32, i32, i32
  }
  func.func @transform_4(%arg0: i32) -> (i32, i32, i32) {
    %c0_i32 = arith.constant 0 : i32
    %c0_i32_0 = arith.constant 0 : i32
    %c0_i32_1 = arith.constant 0 : i32
    return %c0_i32, %arg0, %c0_i32_0 : i32, i32, i32
  }
}

</mosaic_0001>

<llo_original>
// kernel: tpu_custom_call.1
$region0: #{tpu_custom_call.1}
  #allocation0 [shape = 'u32[]', space=smem, size = 0x4, offset = 0x4, fixed_abs, tag = 'smem constant byte address 0x4 - core index']
  #allocation1 [shape = 'u32[72,128]{1,0:T(1,128)}', space=vmem, size = 0x9000, scoped, tag = 'internal scratch']
  %s0 = inlined_call_operand.vmem [shape: f32[8,8,32], index: 0, kind: input, shape index: {}]
  %s1 = inlined_call_operand.vmem [shape: f32[32,128], index: 1, kind: input, shape index: {}]
  %s2 = inlined_call_operand.vmem [shape: f32[128,1], index: 2, kind: input, shape index: {}]
  %s3 = inlined_call_operand.hbm [shape: f32[8,1,32], index: 3, kind: output, shape index: {0}]
  %s4 = inlined_call_operand.vmem [shape: f32[8,8,1], index: 4, kind: output, shape index: {1}]
  %5 = xla_tuple %s3, %s4
  %s6 = sld [smem:[#allocation0]]
  $region30: #{tpu_custom_call.1} parent=0
    _
  %s8 = ssub.s32 1, %s6
  %s9 = scalar_select 0, %s8, %s6
  $region1: #{tpu_custom_call.1} parent=0
    #allocation2 [shape = 'u8[4096]{0}', space=vmem, size = 0x1000, scoped, tag = 'output window, operand 0, single buffered']
    #allocation3 [shape = 's32[1]{0}', space=sflag, size = 0x4, scoped, tag = 'scoped memory for tpu_custom_call.1']
    %10 = vsyncpa [#allocation3], 0
    // Predicated region
    $region2: #{tpu_custom_call.1} parent=1 // pred_check
      _
    $region3: #{tpu_custom_call.1} parent=1 // pred_check_branch
      %12 = sbr.rel (0) target = $region5
    $region4: #{tpu_custom_call.1} parent=1 // pred_region
      _
    $region5: #{tpu_custom_call.1} parent=1 // pred_fallthru
      _
    // Predicated region
    $region6: #{tpu_custom_call.1} parent=1 // pred_check
      _
    $region7: #{tpu_custom_call.1} parent=1 // pred_check_branch
      %14 = sbr.rel (0) target = $region9
    $region8: #{tpu_custom_call.1} parent=1 // pred_region
      _
    $region9: #{tpu_custom_call.1} parent=1 // pred_fallthru
      _
    // Predicated region
    $region10: #{tpu_custom_call.1} parent=1 // pred_check
      _
    $region11: #{tpu_custom_call.1} parent=1 // pred_check_branch
      %16 = sbr.rel (0) target = $region13
    $region12: #{tpu_custom_call.1} parent=1 // pred_region
      _
    $region13: #{tpu_custom_call.1} parent=1 // pred_fallthru
      _
    %v17 = vld [vmem:[%s0] sm:$0xff]
    %v18 = vld [vmem:[%s0 + $0x8] sm:$0xff]
    %v19 = vld [vmem:[%s0 + $0x10] sm:$0xff]
    %v20 = vld [vmem:[%s0 + $0x18] sm:$0xff]
    %v21 = vld [vmem:[%s0 + $0x20] sm:$0xff]
    %v22 = vld [vmem:[%s0 + $0x28] sm:$0xff]
    %v23 = vld [vmem:[%s0 + $0x30] sm:$0xff]
    %v24 = vld [vmem:[%s0 + $0x38] sm:$0xff]
    %v25 = vld [vmem:[%s1] sm:$0xff]
    %v26 = vld [vmem:[%s1 + $0x8] sm:$0xff]
    %v27 = vld [vmem:[%s1 + $0x10] sm:$0xff]
    %v28 = vld [vmem:[%s1 + $0x18] sm:$0xff]
    %vm29 = vcmask 261120
    %v31 = vsel %vm29, %v17, 0
    %v34 = vsel %vm29, %v18, 0
    %v37 = vsel %vm29, %v19, 0
    %v40 = vsel %vm29, %v20, 0
    %v43 = vsel %vm29, %v21, 0
    %v46 = vsel %vm29, %v22, 0
    %v49 = vsel %vm29, %v23, 0
    %v52 = vsel %vm29, %v24, 0
    %54 = vmatpush.msra.mxu0 0.0
    %55 = vmatpush.msra.mxu0 0.0
    %56 = vmatpush.msra.mxu0 0.0
    %57 = vmatpush.msra.mxu0 0.0
    %58 = vmatpush.msra.mxu0 0.0
    %59 = vmatpush.msra.mxu0 0.0
    %60 = vmatpush.msra.mxu0 0.0
    %61 = vmatpush.msra.mxu0 0.0
    %62 = vmatpush.msra.mxu0 0.0
    %63 = vmatpush.msra.mxu0 0.0
    %64 = vmatpush.msra.mxu0 0.0
    %65 = vmatpush.msra.mxu0 0.0
    %66 = vmatpush.msra.mxu0 %v28
    %67 = vmatpush.msra.mxu0 %v27
    %68 = vmatpush.msra.mxu0 %v26
    %69 = vmatpush.msra.mxu0 %v25
    %70 = vmatmul.f32.gmra.mxu0 %v31
    %v71 = vpop.f32.mrf.mxu0
    %v72 = vadd.f32 0.0, %v71
    %73 = vmatmul.f32.gmra.mxu0 %v34
    %v74 = vpop.f32.mrf.mxu0
    %v75 = vadd.f32 0.0, %v74
    %76 = vmatmul.f32.gmra.mxu0 %v37
    %v77 = vpop.f32.mrf.mxu0
    %v78 = vadd.f32 0.0, %v77
    %79 = vmatmul.f32.gmra.mxu0 %v40
    %v80 = vpop.f32.mrf.mxu0
    %v81 = vadd.f32 0.0, %v80
    %82 = vmatmul.f32.gmra.mxu0 %v43
    %v83 = vpop.f32.mrf.mxu0
    %v84 = vadd.f32 0.0, %v83
    %85 = vmatmul.f32.gmra.mxu0 %v46
    %v86 = vpop.f32.mrf.mxu0
    %v87 = vadd.f32 0.0, %v86
    %88 = vmatmul.f32.gmra.mxu0 %v49
    %v89 = vpop.f32.mrf.mxu0
    %v90 = vadd.f32 0.0, %v89
    %91 = vmatmul.f32.gmra.mxu0 %v52
    %v92 = vpop.f32.mrf.mxu0
    %v93 = vadd.f32 0.0, %v92
    %94 = vdwg.mxu0
    %v95 = vtanh.pop %v72
    %v96 = vtanh.pop %v75
    %v97 = vtanh.pop %v78
    %v98 = vtanh.pop %v81
    %v99 = vtanh.pop %v84
    %v100 = vtanh.pop %v87
    %v101 = vtanh.pop %v90
    %v102 = vtanh.pop %v93
    %v103 = vld [vmem:[%s2] sm:$0xff]
    %v104 = vld [vmem:[%s2 + $0x8] sm:$0xff]
    %v105 = vld [vmem:[%s2 + $0x10] sm:$0xff]
    %v106 = vld [vmem:[%s2 + $0x18] sm:$0xff]
    %v107 = vld [vmem:[%s2 + $0x20] sm:$0xff]
    %v108 = vld [vmem:[%s2 + $0x28] sm:$0xff]
    %v109 = vld [vmem:[%s2 + $0x30] sm:$0xff]
    %v110 = vld [vmem:[%s2 + $0x38] sm:$0xff]
    %v111 = vld [vmem:[%s2 + $0x40] sm:$0xff]
    %v112 = vld [vmem:[%s2 + $0x48] sm:$0xff]
    %v113 = vld [vmem:[%s2 + $0x50] sm:$0xff]
    %v114 = vld [vmem:[%s2 + $0x58] sm:$0xff]
    %v115 = vld [vmem:[%s2 + $0x60] sm:$0xff]
    %v116 = vld [vmem:[%s2 + $0x68] sm:$0xff]
    %v117 = vld [vmem:[%s2 + $0x70] sm:$0xff]
    %v118 = vld [vmem:[%s2 + $0x78] sm:$0xff]
    %119 = vmatpush.msra.mxu0 %v118
    %120 = vmatpush.msra.mxu0 %v117
    %121 = vmatpush.msra.mxu0 %v116
    %122 = vmatpush.msra.mxu0 %v115
    %123 = vmatpush.msra.mxu0 %v114
    %124 = vmatpush.msra.mxu0 %v113
    %125 = vmatpush.msra.mxu0 %v112
    %126 = vmatpush.msra.mxu0 %v111
    %127 = vmatpush.msra.mxu0 %v110
    %128 = vmatpush.msra.mxu0 %v109
    %129 = vmatpush.msra.mxu0 %v108
    %130 = vmatpush.msra.mxu0 %v107
    %131 = vmatpush.msra.mxu0 %v106
    %132 = vmatpush.msra.mxu0 %v105
    %133 = vmatpush.msra.mxu0 %v104
    %134 = vmatpush.msra.mxu0 %v103
    %135 = vmatmul.f32.gmra.mxu0 %v95
    %v136 = vpop.f32.mrf.mxu0
    %v137 = vadd.f32 0.0, %v136
    %138 = vmatmul.f32.gmra.mxu0 %v96
    %v139 = vpop.f32.mrf.mxu0
    %v140 = vadd.f32 0.0, %v139
    %141 = vmatmul.f32.gmra.mxu0 %v97
    %v142 = vpop.f32.mrf.mxu0
    %v143 = vadd.f32 0.0, %v142
    %144 = vmatmul.f32.gmra.mxu0 %v98
    %v145 = vpop.f32.mrf.mxu0
    %v146 = vadd.f32 0.0, %v145
    %147 = vmatmul.f32.gmra.mxu0 %v99
    %v148 = vpop.f32.mrf.mxu0
    %v149 = vadd.f32 0.0, %v148
    %150 = vmatmul.f32.gmra.mxu0 %v100
    %v151 = vpop.f32.mrf.mxu0
    %v152 = vadd.f32 0.0, %v151
    %153 = vmatmul.f32.gmra.mxu0 %v101
    %v154 = vpop.f32.mrf.mxu0
    %v155 = vadd.f32 0.0, %v154
    %156 = vmatmul.f32.gmra.mxu0 %v102
    %v157 = vpop.f32.mrf.mxu0
    %v158 = vadd.f32 0.0, %v157
    %159 = vdwg.mxu0
    %vm160 = vcmask 7168
    %v161 = vsel %vm160, %v137, -inf
    %v162 = vsel %vm160, %v140, -inf
    %v163 = vsel %vm160, %v143, -inf
    %v164 = vsel %vm160, %v146, -inf
    %v165 = vsel %vm160, %v149, -inf
    %v166 = vmax.f32 %v161, %v165
    %v167 = vsel %vm160, %v152, -inf
    %v168 = vmax.f32 %v162, %v167
    %v169 = vsel %vm160, %v155, -inf
    %v170 = vmax.f32 %v163, %v169
    %v171 = vsel %vm160, %v158, -inf
    %v172 = vmax.f32 %v164, %v171
    %v173 = vmax.f32 %v166, %v168
    %v174 = vmax.f32 %v170, %v172
    %v175 = vmax.f32 %v173, %v174
    %v176 = vsub.f32 %v137, %v175
    %v177 = vsub.f32 %v140, %v175
    %v178 = vsub.f32 %v143, %v175
    %v179 = vsub.f32 %v146, %v175
    %v180 = vsub.f32 %v149, %v175
    %v181 = vsub.f32 %v152, %v175
    %v182 = vsub.f32 %v155, %v175
    %v183 = vsub.f32 %v158, %v175
    %v184 = vmul.f32 %v176, 1.442695
    %v185 = vpow.pop %v184
    %v186 = vmul.f32 %v177, 1.442695
    %v187 = vpow.pop %v186
    %v188 = vmul.f32 %v178, 1.442695
    %v189 = vpow.pop %v188
    %v190 = vmul.f32 %v179, 1.442695
    %v191 = vpow.pop %v190
    %v192 = vmul.f32 %v180, 1.442695
    %v193 = vpow.pop %v192
    %v194 = vmul.f32 %v181, 1.442695
    %v195 = vpow.pop %v194
    %v196 = vmul.f32 %v182, 1.442695
    %v197 = vpow.pop %v196
    %v198 = vmul.f32 %v183, 1.442695
    %v199 = vpow.pop %v198
    %v200 = vsel %vm160, %v185, 0.0
    %v201 = vsel %vm160, %v187, 0.0
    %v202 = vadd.f32 %v200, %v201
    %v203 = vsel %vm160, %v189, 0.0
    %v204 = vadd.f32 %v202, %v203
    %v205 = vsel %vm160, %v191, 0.0
    %v206 = vadd.f32 %v204, %v205
    %v207 = vsel %vm160, %v193, 0.0
    %v208 = vadd.f32 %v206, %v207
    %v209 = vsel %vm160, %v195, 0.0
    %v210 = vadd.f32 %v208, %v209
    %v211 = vsel %vm160, %v197, 0.0
    %v212 = vadd.f32 %v210, %v211
    %v213 = vsel %vm160, %v199, 0.0
    %v214 = vadd.f32 %v212, %v213
    %v215 = vrcp.pop %v214
    %v216 = vmul.f32 %v214, %v215
    %v217 = vsub.f32 2.0, %v216
    %v218 = vmul.f32 %v215, %v217
    %v219 = vmul.f32 %v185, %v218
    %v220 = vmul.f32 %v187, %v218
    %v221 = vmul.f32 %v189, %v218
    %v222 = vmul.f32 %v191, %v218
    %v223 = vmul.f32 %v193, %v218
    %v224 = vmul.f32 %v195, %v218
    %v225 = vmul.f32 %v197, %v218
    %v226 = vmul.f32 %v199, %v218
    %227 = vst.msk [vmem:[%s4] sm:$0xff] %vm160, %v219
    %228 = vst.msk [vmem:[%s4 + $0x8] sm:$0xff] %vm160, %v220
    %229 = vst.msk [vmem:[%s4 + $0x10] sm:$0xff] %vm160, %v221
    %230 = vst.msk [vmem:[%s4 + $0x18] sm:$0xff] %vm160, %v222
    %231 = vst.msk [vmem:[%s4 + $0x20] sm:$0xff] %vm160, %v223
    %232 = vst.msk [vmem:[%s4 + $0x28] sm:$0xff] %vm160, %v224
    %233 = vst.msk [vmem:[%s4 + $0x30] sm:$0xff] %vm160, %v225
    %234 = vst.msk [vmem:[%s4 + $0x38] sm:$0xff] %vm160, %v226
    %236 = vset.pattern.permute.xlu0 0
    %237 = vperm.xlu0 %236, %v219
    %v238 = vpop.permute.xlu0 %237
    %241 = vset.pattern.permute.xlu0 0
    %242 = vperm.xlu0 %241, %v220
    %v243 = vpop.permute.xlu0 %242
    %246 = vset.pattern.permute.xlu0 0
    %247 = vperm.xlu0 %246, %v221
    %v248 = vpop.permute.xlu0 %247
    %251 = vset.pattern.permute.xlu0 0
    %252 = vperm.xlu0 %251, %v222
    %v253 = vpop.permute.xlu0 %252
    %256 = vset.pattern.permute.xlu0 0
    %257 = vperm.xlu0 %256, %v223
    %v258 = vpop.permute.xlu0 %257
    %261 = vset.pattern.permute.xlu0 0
    %262 = vperm.xlu0 %261, %v224
    %v263 = vpop.permute.xlu0 %262
    %266 = vset.pattern.permute.xlu0 0
    %267 = vperm.xlu0 %266, %v225
    %v268 = vpop.permute.xlu0 %267
    %271 = vset.pattern.permute.xlu0 0
    %272 = vperm.xlu0 %271, %v226
    %v273 = vpop.permute.xlu0 %272
    %v275 = vmul.f32 %v238, %v17
    %v276 = vmul.f32 %v243, %v18
    %v277 = vmul.f32 %v248, %v19
    %v278 = vmul.f32 %v253, %v20
    %v279 = vmul.f32 %v258, %v21
    %v280 = vmul.f32 %v263, %v22
    %v281 = vmul.f32 %v268, %v23
    %v282 = vmul.f32 %v273, %v24
    %v283 = vsel %vm29, %v275, 0.0
    %v284 = vsel %vm29, %v276, 0.0
    %v285 = vadd.f32 %v283, %v284
    %v286 = vsel %vm29, %v277, 0.0
    %v287 = vadd.f32 %v285, %v286
    %v288 = vsel %vm29, %v278, 0.0
    %v289 = vadd.f32 %v287, %v288
    %v290 = vsel %vm29, %v279, 0.0
    %v291 = vadd.f32 %v289, %v290
    %v292 = vsel %vm29, %v280, 0.0
    %v293 = vadd.f32 %v291, %v292
    %v294 = vsel %vm29, %v281, 0.0
    %v295 = vadd.f32 %v293, %v294
    %v296 = vsel %vm29, %v282, 0.0
    %v297 = vadd.f32 %v295, %v296
    %v299 = vrot.slane %v297, 1
    %v300 = vrot.slane %v297, 2
    %v301 = vrot.slane %v297, 3
    %v302 = vrot.slane %v297, 4
    %v303 = vrot.slane %v297, 5
    %v304 = vrot.slane %v297, 6
    %v305 = vrot.slane %v297, 7
    %vm313 = vcmask 253952
    %314 = vst.msk [vmem:[#allocation2] sm:$0x1] %vm313, %v297
    %315 = vst.msk [vmem:[#allocation2 + $0x1] sm:$0x1] %vm313, %v299
    %316 = vst.msk [vmem:[#allocation2 + $0x2] sm:$0x1] %vm313, %v300
    %317 = vst.msk [vmem:[#allocation2 + $0x3] sm:$0x1] %vm313, %v301
    %318 = vst.msk [vmem:[#allocation2 + $0x4] sm:$0x1] %vm313, %v302
    %319 = vst.msk [vmem:[#allocation2 + $0x5] sm:$0x1] %vm313, %v303
    %320 = vst.msk [vmem:[#allocation2 + $0x6] sm:$0x1] %vm313, %v304
    %321 = vst.msk [vmem:[#allocation2 + $0x7] sm:$0x1] %vm313, %v305
    // Predicated region
    $region14: #{tpu_custom_call.1} parent=1 // pred_check
      _
    $region15: #{tpu_custom_call.1} parent=1 // pred_check_branch
      %323 = sbr.rel (0) target = $region17
    $region16: #{tpu_custom_call.1} parent=1 // pred_region
      %325 = vsyncadd [#allocation3], 0
      %s326 = sshll.u32 [#allocation2], 4
      %s327 = int_to_ptr.vmem [resolvable:$true] %s326
      %s328 = sshll.u32 %s3, 4
      %s329 = int_to_ptr.hbm [resolvable:$true] %s328
      %334 = dma.vmem_to_hbm [thread:$0]  %s327, 128, %s329, [#allocation3], 16, 16, 1
    $region17: #{tpu_custom_call.1} parent=1 // pred_fallthru
      _
    // Predicated region
    $region18: #{tpu_custom_call.1} parent=1 // pred_check
      _
    $region19: #{tpu_custom_call.1} parent=1 // pred_check_branch
      %336 = sbr.rel (0) target = $region21
    $region20: #{tpu_custom_call.1} parent=1 // pred_region
      _
    $region21: #{tpu_custom_call.1} parent=1 // pred_fallthru
      _
    // Predicated region
    $region22: #{tpu_custom_call.1} parent=1 // pred_check
      _
    $region23: #{tpu_custom_call.1} parent=1 // pred_check_branch
      %338 = sbr.rel (0) target = $region25
    $region24: #{tpu_custom_call.1} parent=1 // pred_region
      %340 = dma.done [#allocation3], 128
    $region25: #{tpu_custom_call.1} parent=1 // pred_fallthru
      _
    // Predicated region
    $region26: #{tpu_custom_call.1} parent=1 // pred_check
      _
    $region27: #{tpu_custom_call.1} parent=1 // pred_check_branch
      %342 = sbr.rel (0) target = $region29
    $region28: #{tpu_custom_call.1} parent=1 // pred_region
      _
    $region29: #{tpu_custom_call.1} parent=1 // pred_fallthru
      _
    %343 = vsyncpa [#allocation3], 1

</llo_original>
